<compile_context>
chip_gen: v6e
topology: v6e:2x2x1
jax: 0.10.0
libtpu: 0.0.40
codegen_flags: <defaults>
</compile_context>

<pallas_src>
import functools
import math

import jax
import jax.numpy as jnp
from jax import lax
from jax.experimental import pallas as pl
from jax.experimental.pallas import tpu as pltpu

LANE = 128  # TPU lane width; pad feature/output dims to multiples of this.
_MiB = 1024 * 1024


def _round_up(v, m):
    return (v + m - 1) // m * m


def _pad2(a, rows, cols):
    return jnp.pad(a, ((0, rows - a.shape[0]), (0, cols - a.shape[1])))


def _xavier_uniform(key, fan_in, fan_out, dtype=jnp.float32):
    # Matches torch.nn.init.xavier_uniform_ distribution (gain=1).
    bound = (6.0 / (fan_in + fan_out)) ** 0.5
    return jax.random.uniform(key, (fan_in, fan_out), dtype, minval=-bound, maxval=bound)


def _vmem_hint(estimated_bytes):
    """Return a vmem_limit_bytes override only when the default scoped limit would
    be too small; clamp to the smallest physical VMEM across supported gens (v7x)."""
    if estimated_bytes <= 28 * _MiB:
        return None
    return int(min(estimated_bytes + 4 * _MiB, 64 * _MiB))


# ----------------------------------------------------------------------------- kernels


def _make_mlp_kernel(depth):
    """Computes BOTH MLP towers for one row tile of x (shared x DMA)."""

    def kernel(*refs):
        # refs = [x, w1_0..w1_{d-1}, b1_0.., w2_0.., b2_0.., h1_out, h2_out]
        x_ref = refs[0]
        w1_refs = refs[1:1 + depth]
        b1_refs = refs[1 + depth:1 + 2 * depth]
        w2_refs = refs[1 + 2 * depth:1 + 3 * depth]
        b2_refs = refs[1 + 3 * depth:1 + 4 * depth]
        h1_ref = refs[1 + 4 * depth]
        h2_ref = refs[2 + 4 * depth]

        x = x_ref[...]  # (tile_m_mlp, f_in_p) bf16

        def run_mlp(w_refs, b_refs):
            h = x
            for i in range(depth):
                # MXU matmul in bf16 with f32 accumulation.
                acc = jnp.dot(h, w_refs[i][...], preferred_element_type=jnp.float32)
                # bias-add + ReLU in f32 (VPU, correct on v5e too), back to bf16 for MXU.
                acc = jnp.maximum(acc + b_refs[i][...], 0.0)
                h = acc.astype(jnp.bfloat16)
            return h

        h1_ref[...] = run_mlp(w1_refs, b1_refs)
        h2_ref[...] = run_mlp(w2_refs, b2_refs)

    return kernel


def _make_outer_kernel(tn, h2_resident):
    """out[i*tm:(i+1)*tm, j*tn:(j+1)*tn] = h1_tile @ h2_tile^T.

    If h2_resident, h2_ref holds ALL of h2 (fetched from HBM exactly once via a
    constant index_map) and we slice the j-th row block in VMEM; otherwise h2_ref is
    the streamed (tn, f_out_p) block. The contraction is over the LAST dims of both
    operands: no in-kernel transpose / XLU traffic, the MXU is fed directly.
    """

    def kernel(h1_ref, h2_ref, o_ref):
        h1 = h1_ref[...]
        if h2_resident:
            j = pl.program_id(1)
            start = pl.multiple_of(j * tn, 128)
            h2 = h2_ref[pl.ds(start, tn), :]
        else:
            h2 = h2_ref[...]
        o_ref[...] = lax.dot_general(
            h1,
            h2,
            dimension_numbers=(((1,), (1,)), ((), ())),
            preferred_element_type=jnp.float32,
        ).astype(o_ref.dtype)

    return kernel


# ----------------------------------------------------------------------------- wrapper


@functools.partial(
    jax.jit,
    static_argnames=("tile_m_mlp", "tile_m_out", "tile_n_out", "out_dtype"),
)
def regular_block_forward(
    x,
    params1,
    params2,
    *,
    tile_m_mlp=256,   # pass-1 row tile (feeds the 256-wide MXU on v6e/v7x)
    tile_m_out=256,   # pass-2 output row tile
    tile_n_out=512,   # pass-2 output col tile (wide, lane-dense f32 stores)
    out_dtype=jnp.float32,
):
    """x: (N, in_features). params{1,2}: list of (W (fan_in, fan_out), b (1, fan_out))."""
    depth = len(params1)
    n, f_in = x.shape
    f_out = params1[0][0].shape[1]

    f_in_p = _round_up(f_in, LANE)
    f_out_p = _round_up(f_out, LANE)

    # Decoupled tilings; clamp to the (128-padded) problem size, then pad N to a
    # multiple of lcm(all tiles) so no grid axis silently truncates.
    n128 = _round_up(n, LANE)
    tm_mlp = min(tile_m_mlp, n128)
    tm_out = min(tile_m_out, n128)
    tn_out = min(tile_n_out, n128)
    n_p = _round_up(n, math.lcm(tm_mlp, tm_out, tn_out))
    assert n_p % tm_mlp == 0 and n_p % tm_out == 0 and n_p % tn_out == 0

    # Zero-pad + cast matmul operands to bf16 (biases stay f32 for the f32 bias/ReLU).
    x_p = _pad2(x, n_p, f_in_p).astype(jnp.bfloat16)

    def prep(params):
        ws, bs = [], []
        for (w, b) in params:
            ws.append(_pad2(w, _round_up(w.shape[0], LANE), f_out_p).astype(jnp.bfloat16))
            bs.append(_pad2(b.reshape(1, -1), 1, f_out_p).astype(jnp.float32))
        return ws, bs

    w1s, b1s = prep(params1)
    w2s, b2s = prep(params2)

    # ----- pass 1: both MLP towers, 1-D grid over row tiles, weights VMEM-resident.
    def _resident(a):
        return pl.BlockSpec(a.shape, lambda i: (0, 0))

    mlp_in_specs = (
        [pl.BlockSpec((tm_mlp, f_in_p), lambda i: (i, 0))]
        + [_resident(w) for w in w1s]
        + [_resident(b) for b in b1s]
        + [_resident(w) for w in w2s]
        + [_resident(b) for b in b2s]
    )
    mlp_out_specs = (
        pl.BlockSpec((tm_mlp, f_out_p), lambda i: (i, 0)),
        pl.BlockSpec((tm_mlp, f_out_p), lambda i: (i, 0)),
    )
    mlp_flops = 4 * n_p * (f_in_p * f_out_p + (depth - 1) * f_out_p * f_out_p)
    mlp_bytes = (
        x_p.size * 2
        + sum(w.size for w in w1s + w2s) * 2
        + sum(b.size for b in b1s + b2s) * 4
        + 2 * n_p * f_out_p * 2
    )
    # Resident weights/biases are still double-buffered by the default pipeline;
    # account for that when deciding whether to raise the scoped-VMEM limit.
    pass1_vmem = (
        2 * 2 * tm_mlp * f_in_p                                          # x, bf16
        + 2 * 2 * 2 * (f_in_p * f_out_p + (depth - 1) * f_out_p * f_out_p)  # weights
        + 2 * 2 * 4 * depth * f_out_p                                    # biases, f32
        + 2 * 2 * 2 * tm_mlp * f_out_p                                   # h1/h2 out
    )
    cp1 = dict(dimension_semantics=("parallel",))
    hint1 = _vmem_hint(pass1_vmem)
    if hint1 is not None:
        cp1["vmem_limit_bytes"] = hint1

    h1, h2 = pl.pallas_call(
        _make_mlp_kernel(depth),
        grid=(n_p // tm_mlp,),
        in_specs=mlp_in_specs,
        out_specs=mlp_out_specs,
        out_shape=(
            jax.ShapeDtypeStruct((n_p, f_out_p), jnp.bfloat16),
            jax.ShapeDtypeStruct((n_p, f_out_p), jnp.bfloat16),
        ),
        compiler_params=pltpu.CompilerParams(**cp1),
        cost_estimate=pl.CostEstimate(
            flops=int(mlp_flops), transcendentals=0, bytes_accessed=int(mlp_bytes)
        ),
    )(x_p, *w1s, *b1s, *w2s, *b2s)

    # ----- pass 2: out = mlp1 @ mlp2^T, tiled (i, j) grid over the (N, N) output.
    # Keep h2 fully VMEM-resident (read from HBM exactly once) when it fits a
    # conservative budget; otherwise stream wide (tn_out, f_out_p) tiles.
    out_itemsize = jnp.dtype(out_dtype).itemsize
    h2_resident = (n_p * f_out_p * 2) <= 16 * _MiB
    if h2_resident:
        h2_spec = pl.BlockSpec((n_p, f_out_p), lambda i, j: (0, 0))
        h2_hbm_reads = n_p * f_out_p * 2
        h2_vmem = 2 * n_p * f_out_p * 2
    else:
        h2_spec = pl.BlockSpec((tn_out, f_out_p), lambda i, j: (j, 0))
        h2_hbm_reads = (n_p // tm_out) * n_p * f_out_p * 2
        h2_vmem = 2 * tn_out * f_out_p * 2

    mm_flops = 2 * n_p * n_p * f_out_p
    mm_bytes = n_p * f_out_p * 2 + h2_hbm_reads + n_p * n_p * out_itemsize
    pass2_vmem = (
        2 * tm_out * f_out_p * 2        # h1 tile, double-buffered bf16
        + h2_vmem                       # h2 (resident or streamed)
        + 2 * tm_out * tn_out * out_itemsize  # output tile, double-buffered
    )
    cp2 = dict(dimension_semantics=("parallel", "parallel"))
    hint2 = _vmem_hint(pass2_vmem)
    if hint2 is not None:
        cp2["vmem_limit_bytes"] = hint2

    out_p = pl.pallas_call(
        _make_outer_kernel(tn_out, h2_resident),
        grid=(n_p // tm_out, n_p // tn_out),
        in_specs=[
            pl.BlockSpec((tm_out, f_out_p), lambda i, j: (i, 0)),
            h2_spec,
        ],
        out_specs=pl.BlockSpec((tm_out, tn_out), lambda i, j: (i, j)),
        out_shape=jax.ShapeDtypeStruct((n_p, n_p), out_dtype),
        compiler_params=pltpu.CompilerParams(**cp2),
        cost_estimate=pl.CostEstimate(
            flops=int(mm_flops), transcendentals=0, bytes_accessed=int(mm_bytes)
        ),
    )(h1, h2)

    # Slice the zero-padding back off.
    return out_p[:n, :n]


# ----------------------------------------------------------------------------- init / ref


def init_regular_block_params(key, in_features, out_features, depth_of_mlp):
    """Deterministic xavier-uniform weights (zero biases), mirroring _init_weights.
    Weights are stored pre-transposed as (fan_in, fan_out) so kernels compute h @ W."""
    params1, params2 = [], []
    fan_in = in_features
    for _ in range(depth_of_mlp):
        key, k1, k2 = jax.random.split(key, 3)
        w1 = _xavier_uniform(k1, fan_in, out_features)
        w2 = _xavier_uniform(k2, fan_in, out_features)
        params1.append((w1, jnp.zeros((1, out_features), jnp.float32)))
        params2.append((w2, jnp.zeros((1, out_features), jnp.float32)))
        fan_in = out_features
    # NOTE: SkipConnection weights exist in the torch __init__ but are unused in forward.
    return params1, params2


def reference_forward(x, params1, params2):
    """Pure-JAX f32 reference for correctness checking."""
    h1 = x
    for w, b in params1:
        h1 = jnp.maximum(h1 @ w + b, 0.0)
    h2 = x
    for w, b in params2:
        h2 = jnp.maximum(h2 @ w + b, 0.0)
    return h1 @ h2.T


if __name__ == "__main__":
    # Small shapes consistent with the module's forward: x is (N, in_features).
    # TODO(synk): for production use, batch many RegularBlock instances per pallas_call
    # (leading grid axis) — at these tiny shapes launch/DMA latency dominates.
    N = 16
    in_features = 8
    out_features = 32
    depth_of_mlp = 2

    key = jax.random.PRNGKey(0)
    key, kx = jax.random.split(key)
    x = jax.random.normal(kx, (N, in_features), jnp.float32)

    params1, params2 = init_regular_block_params(key, in_features, out_features, depth_of_mlp)

    out = regular_block_forward(x, params1, params2)
    out = jax.block_until_ready(out)

    ref = reference_forward(x, params1, params2)
    assert out.shape == (N, N)
    # Matmul inputs are bf16 (f32 accumulation), so tolerance vs the pure-f32 reference
    # is loosened accordingly (sized for depth=2, f_out=32).
    assert jnp.allclose(out, ref, atol=5e-2, rtol=5e-2), float(jnp.max(jnp.abs(out - ref)))

    print("KERNEL_OK")
</pallas_src>

<mosaic_0001>
module attributes {stable_mosaic.version = 11 : i64} {
  func.func @kernel(%arg0: i32, %arg1: i32, %arg2: memref<128x128xbf16, #tpu.memory_space<vmem>>, %arg3: memref<128x128xbf16, #tpu.memory_space<vmem>>, %arg4: memref<128x128xf32, #tpu.memory_space<vmem>>) attributes {dimension_semantics = [#tpu.dimension_semantics<parallel>, #tpu.dimension_semantics<parallel>], iteration_bounds = array<i64: 1, 1>, scalar_prefetch = 0 : i64, scratch_operands = 0 : i64, tpu.core_type = #tpu.core_type<tc>, window_params = [{transform_indices = @transform_0, window_bounds = array<i64: 128, 128>}, {pipeline_mode = #tpu.pipeline_mode<synchronous>, transform_indices = @transform_1, window_bounds = array<i64: 128, 128>}, {transform_indices = @transform_2, window_bounds = array<i64: 128, 128>}]} {
    %c0 = arith.constant 0 : index
    %c0_0 = arith.constant 0 : index
    %0 = vector.load %arg2[%c0, %c0_0] : memref<128x128xbf16, #tpu.memory_space<vmem>>, vector<128x128xbf16>
    %c128_i32 = arith.constant 128 : i32
    %1 = arith.muli %arg1, %c128_i32 : i32
    %2 = tpu.assume_multiple %1, 128 : i32
    %3 = arith.index_cast %2 : i32 to index
    %c0_1 = arith.constant 0 : index
    %4 = vector.load %arg3[%3, %c0_1] : memref<128x128xbf16, #tpu.memory_space<vmem>>, vector<128x128xbf16>
    %cst = arith.constant dense<0.000000e+00> : vector<128x128xf32>
    %5 = tpu.matmul %0, %4, %cst {dimension_numbers = #tpu.dot_dimension_numbers<[1], [1], [0], [0], [0, 0, 1, 0], [], []>} : vector<128x128xbf16>, vector<128x128xbf16>, vector<128x128xf32> -> vector<128x128xf32>
    %c0_2 = arith.constant 0 : index
    %c0_3 = arith.constant 0 : index
    %6 = vector.load %arg4[%c0_2, %c0_3] : memref<128x128xf32, #tpu.memory_space<vmem>>, vector<128x128xf32>
    tpu.vector_store %arg4[%c0_2, %c0_3], %5 {strides = array<i32>} : memref<128x128xf32, #tpu.memory_space<vmem>>, vector<128x128xf32>,
    return
  }
  func.func @transform_0(%arg0: i32, %arg1: i32) -> (i32, i32) {
    %c0_i32 = arith.constant 0 : i32
    %c0_i32_0 = arith.constant 0 : i32
    return %arg0, %c0_i32 : i32, i32
  }
  func.func @transform_1(%arg0: i32, %arg1: i32) -> (i32, i32) {
    %c0_i32 = arith.constant 0 : i32
    %c0_i32_0 = arith.constant 0 : i32
    %c0_i32_1 = arith.constant 0 : i32
    return %c0_i32, %c0_i32_0 : i32, i32
  }
  func.func @transform_2(%arg0: i32, %arg1: i32) -> (i32, i32) {
    %c0_i32 = arith.constant 0 : i32
    return %arg0, %arg1 : i32, i32
  }
}

module attributes {stable_mosaic.version = 11 : i64} {
  func.func @kernel(%arg0: i32, %arg1: memref<128x128xbf16, #tpu.memory_space<vmem>>, %arg2: memref<128x128xbf16, #tpu.memory_space<vmem>>, %arg3: memref<128x128xbf16, #tpu.memory_space<vmem>>, %arg4: memref<1x128xf32, #tpu.memory_space<vmem>>, %arg5: memref<1x128xf32, #tpu.memory_space<vmem>>, %arg6: memref<128x128xbf16, #tpu.memory_space<vmem>>, %arg7: memref<128x128xbf16, #tpu.memory_space<vmem>>, %arg8: memref<1x128xf32, #tpu.memory_space<vmem>>, %arg9: memref<1x128xf32, #tpu.memory_space<vmem>>, %arg10: memref<128x128xbf16, #tpu.memory_space<vmem>>, %arg11: memref<128x128xbf16, #tpu.memory_space<vmem>>) attributes {dimension_semantics = [#tpu.dimension_semantics<parallel>], iteration_bounds = array<i64: 1>, scalar_prefetch = 0 : i64, scratch_operands = 0 : i64, tpu.core_type = #tpu.core_type<tc>, window_params = [{transform_indices = @transform_0, window_bounds = array<i64: 128, 128>}, {pipeline_mode = #tpu.pipeline_mode<synchronous>, transform_indices = @transform_1, window_bounds = array<i64: 128, 128>}, {pipeline_mode = #tpu.pipeline_mode<synchronous>, transform_indices = @transform_2, window_bounds = array<i64: 128, 128>}, {pipeline_mode = #tpu.pipeline_mode<synchronous>, transform_indices = @transform_3, window_bounds = array<i64: 1, 128>}, {pipeline_mode = #tpu.pipeline_mode<synchronous>, transform_indices = @transform_4, window_bounds = array<i64: 1, 128>}, {pipeline_mode = #tpu.pipeline_mode<synchronous>, transform_indices = @transform_5, window_bounds = array<i64: 128, 128>}, {pipeline_mode = #tpu.pipeline_mode<synchronous>, transform_indices = @transform_6, window_bounds = array<i64: 128, 128>}, {pipeline_mode = #tpu.pipeline_mode<synchronous>, transform_indices = @transform_7, window_bounds = array<i64: 1, 128>}, {pipeline_mode = #tpu.pipeline_mode<synchronous>, transform_indices = @transform_8, window_bounds = array<i64: 1, 128>}, {transform_indices = @transform_9, window_bounds = array<i64: 128, 128>}, {transform_indices = @transform_10, window_bounds = array<i64: 128, 128>}]} {
    %c0 = arith.constant 0 : index
    %c0_0 = arith.constant 0 : index
    %0 = vector.load %arg1[%c0, %c0_0] : memref<128x128xbf16, #tpu.memory_space<vmem>>, vector<128x128xbf16>
    %c0_1 = arith.constant 0 : index
    %c0_2 = arith.constant 0 : index
    %1 = vector.load %arg2[%c0_1, %c0_2] : memref<128x128xbf16, #tpu.memory_space<vmem>>, vector<128x128xbf16>
    %cst = arith.constant dense<0.000000e+00> : vector<128x128xf32>
    %2 = tpu.matmul %0, %1, %cst {dimension_numbers = #tpu.dot_dimension_numbers<[1], [0], [0], [1], [0, 0, 1, 1], [], []>} : vector<128x128xbf16>, vector<128x128xbf16>, vector<128x128xf32> -> vector<128x128xf32>
    %c0_3 = arith.constant 0 : index
    %c0_4 = arith.constant 0 : index
    %3 = vector.load %arg4[%c0_3, %c0_4] : memref<1x128xf32, #tpu.memory_space<vmem>>, vector<1x128xf32>
    %4 = vector.broadcast %3 : vector<1x128xf32> to vector<128x128xf32>
    %5 = arith.addf %2, %4 : vector<128x128xf32>
    %cst_5 = arith.constant 0.000000e+00 : f32
    %6 = vector.broadcast %cst_5 : f32 to vector<128x128xf32>
    %7 = arith.maximumf %5, %6 : vector<128x128xf32>
    %8 = arith.truncf %7 : vector<128x128xf32> to vector<128x128xbf16>
    %c0_6 = arith.constant 0 : index
    %c0_7 = arith.constant 0 : index
    %9 = vector.load %arg3[%c0_6, %c0_7] : memref<128x128xbf16, #tpu.memory_space<vmem>>, vector<128x128xbf16>
    %cst_8 = arith.constant dense<0.000000e+00> : vector<128x128xf32>
    %10 = tpu.matmul %8, %9, %cst_8 {dimension_numbers = #tpu.dot_dimension_numbers<[1], [0], [0], [1], [0, 0, 1, 1], [], []>} : vector<128x128xbf16>, vector<128x128xbf16>, vector<128x128xf32> -> vector<128x128xf32>
    %c0_9 = arith.constant 0 : index
    %c0_10 = arith.constant 0 : index
    %11 = vector.load %arg5[%c0_9, %c0_10] : memref<1x128xf32, #tpu.memory_space<vmem>>, vector<1x128xf32>
    %12 = vector.broadcast %11 : vector<1x128xf32> to vector<128x128xf32>
    %13 = arith.addf %10, %12 : vector<128x128xf32>
    %cst_11 = arith.constant 0.000000e+00 : f32
    %14 = vector.broadcast %cst_11 : f32 to vector<128x128xf32>
    %15 = arith.maximumf %13, %14 : vector<128x128xf32>
    %16 = arith.truncf %15 : vector<128x128xf32> to vector<128x128xbf16>
    %c0_12 = arith.constant 0 : index
    %c0_13 = arith.constant 0 : index
    %17 = vector.load %arg10[%c0_12, %c0_13] : memref<128x128xbf16, #tpu.memory_space<vmem>>, vector<128x128xbf16>
    tpu.vector_store %arg10[%c0_12, %c0_13], %16 {strides = array<i32>} : memref<128x128xbf16, #tpu.memory_space<vmem>>, vector<128x128xbf16>,
    %c0_14 = arith.constant 0 : index
    %c0_15 = arith.constant 0 : index
    %18 = vector.load %arg6[%c0_14, %c0_15] : memref<128x128xbf16, #tpu.memory_space<vmem>>, vector<128x128xbf16>
    %cst_16 = arith.constant dense<0.000000e+00> : vector<128x128xf32>
    %19 = tpu.matmul %0, %18, %cst_16 {dimension_numbers = #tpu.dot_dimension_numbers<[1], [0], [0], [1], [0, 0, 1, 1], [], []>} : vector<128x128xbf16>, vector<128x128xbf16>, vector<128x128xf32> -> vector<128x128xf32>
    %c0_17 = arith.constant 0 : index
    %c0_18 = arith.constant 0 : index
    %20 = vector.load %arg8[%c0_17, %c0_18] : memref<1x128xf32, #tpu.memory_space<vmem>>, vector<1x128xf32>
    %21 = vector.broadcast %20 : vector<1x128xf32> to vector<128x128xf32>
    %22 = arith.addf %19, %21 : vector<128x128xf32>
    %cst_19 = arith.constant 0.000000e+00 : f32
    %23 = vector.broadcast %cst_19 : f32 to vector<128x128xf32>
    %24 = arith.maximumf %22, %23 : vector<128x128xf32>
    %25 = arith.truncf %24 : vector<128x128xf32> to vector<128x128xbf16>
    %c0_20 = arith.constant 0 : index
    %c0_21 = arith.constant 0 : index
    %26 = vector.load %arg7[%c0_20, %c0_21] : memref<128x128xbf16, #tpu.memory_space<vmem>>, vector<128x128xbf16>
    %cst_22 = arith.constant dense<0.000000e+00> : vector<128x128xf32>
    %27 = tpu.matmul %25, %26, %cst_22 {dimension_numbers = #tpu.dot_dimension_numbers<[1], [0], [0], [1], [0, 0, 1, 1], [], []>} : vector<128x128xbf16>, vector<128x128xbf16>, vector<128x128xf32> -> vector<128x128xf32>
    %c0_23 = arith.constant 0 : index
    %c0_24 = arith.constant 0 : index
    %28 = vector.load %arg9[%c0_23, %c0_24] : memref<1x128xf32, #tpu.memory_space<vmem>>, vector<1x128xf32>
    %29 = vector.broadcast %28 : vector<1x128xf32> to vector<128x128xf32>
    %30 = arith.addf %27, %29 : vector<128x128xf32>
    %cst_25 = arith.constant 0.000000e+00 : f32
    %31 = vector.broadcast %cst_25 : f32 to vector<128x128xf32>
    %32 = arith.maximumf %30, %31 : vector<128x128xf32>
    %33 = arith.truncf %32 : vector<128x128xf32> to vector<128x128xbf16>
    %c0_26 = arith.constant 0 : index
    %c0_27 = arith.constant 0 : index
    %34 = vector.load %arg11[%c0_26, %c0_27] : memref<128x128xbf16, #tpu.memory_space<vmem>>, vector<128x128xbf16>
    tpu.vector_store %arg11[%c0_26, %c0_27], %33 {strides = array<i32>} : memref<128x128xbf16, #tpu.memory_space<vmem>>, vector<128x128xbf16>,
    return
  }
  func.func @transform_0(%arg0: i32) -> (i32, i32) {
    %c0_i32 = arith.constant 0 : i32
    %c0_i32_0 = arith.constant 0 : i32
    return %arg0, %c0_i32 : i32, i32
  }
  func.func @transform_1(%arg0: i32) -> (i32, i32) {
    %c0_i32 = arith.constant 0 : i32
    %c0_i32_0 = arith.constant 0 : i32
    %c0_i32_1 = arith.constant 0 : i32
    return %c0_i32, %c0_i32_0 : i32, i32
  }
  func.func @transform_2(%arg0: i32) -> (i32, i32) {
    %c0_i32 = arith.constant 0 : i32
    %c0_i32_0 = arith.constant 0 : i32
    %c0_i32_1 = arith.constant 0 : i32
    return %c0_i32, %c0_i32_0 : i32, i32
  }
  func.func @transform_3(%arg0: i32) -> (i32, i32) {
    %c0_i32 = arith.constant 0 : i32
    %c0_i32_0 = arith.constant 0 : i32
    %c0_i32_1 = arith.constant 0 : i32
    return %c0_i32, %c0_i32_0 : i32, i32
  }
  func.func @transform_4(%arg0: i32) -> (i32, i32) {
    %c0_i32 = arith.constant 0 : i32
    %c0_i32_0 = arith.constant 0 : i32
    %c0_i32_1 = arith.constant 0 : i32
    return %c0_i32, %c0_i32_0 : i32, i32
  }
  func.func @transform_5(%arg0: i32) -> (i32, i32) {
    %c0_i32 = arith.constant 0 : i32
    %c0_i32_0 = arith.constant 0 : i32
    %c0_i32_1 = arith.constant 0 : i32
    return %c0_i32, %c0_i32_0 : i32, i32
  }
  func.func @transform_6(%arg0: i32) -> (i32, i32) {
    %c0_i32 = arith.constant 0 : i32
    %c0_i32_0 = arith.constant 0 : i32
    %c0_i32_1 = arith.constant 0 : i32
    return %c0_i32, %c0_i32_0 : i32, i32
  }
  func.func @transform_7(%arg0: i32) -> (i32, i32) {
    %c0_i32 = arith.constant 0 : i32
    %c0_i32_0 = arith.constant 0 : i32
    %c0_i32_1 = arith.constant 0 : i32
    return %c0_i32, %c0_i32_0 : i32, i32
  }
  func.func @transform_8(%arg0: i32) -> (i32, i32) {
    %c0_i32 = arith.constant 0 : i32
    %c0_i32_0 = arith.constant 0 : i32
    %c0_i32_1 = arith.constant 0 : i32
    return %c0_i32, %c0_i32_0 : i32, i32
  }
  func.func @transform_9(%arg0: i32) -> (i32, i32) {
    %c0_i32 = arith.constant 0 : i32
    %c0_i32_0 = arith.constant 0 : i32
    return %arg0, %c0_i32 : i32, i32
  }
  func.func @transform_10(%arg0: i32) -> (i32, i32) {
    %c0_i32 = arith.constant 0 : i32
    %c0_i32_0 = arith.constant 0 : i32
    return %arg0, %c0_i32 : i32, i32
  }
}

</mosaic_0001>

<llo_original>
// kernel: regular_block_forward.3
$region0: #{regular_block_forward.3}
  #allocation0 [shape = 'u32[]', space=smem, size = 0x4, offset = 0x4, fixed_abs, tag = 'smem constant byte address 0x4 - core index']
  #allocation1 [shape = 'u32[144,128]{1,0:T(1,128)}', space=vmem, size = 0x12000, scoped, tag = 'internal scratch']
  %s0 = inlined_call_operand.vmem [shape: bf16[128,128], index: 0, kind: input, shape index: {}]
  %s1 = inlined_call_operand.vmem [shape: bf16[128,128], index: 1, kind: input, shape index: {}]
  %s2 = inlined_call_operand.vmem [shape: f32[128,128], index: 2, kind: output, shape index: {}]
  %s3 = sld [smem:[#allocation0]]
  $region18: #{regular_block_forward.3} parent=0
    _
  %s5 = ssub.s32 1, %s3
  %s6 = scalar_select 0, %s5, %s3
  // Predicated region
  $region2: #{regular_block_forward.3} parent=0 // pred_check
    _
  $region3: #{regular_block_forward.3} parent=0 // pred_check_branch
    %8 = sbr.rel (0) target = $region5
  $region4: #{regular_block_forward.3} parent=0 // pred_region
    _
  $region5: #{regular_block_forward.3} parent=0 // pred_fallthru
    _
  // Predicated region
  $region6: #{regular_block_forward.3} parent=0 // pred_check
    _
  $region7: #{regular_block_forward.3} parent=0 // pred_check_branch
    %10 = sbr.rel (0) target = $region9
  $region8: #{regular_block_forward.3} parent=0 // pred_region
    _
  $region9: #{regular_block_forward.3} parent=0 // pred_fallthru
    _
  %v12 = vld [vmem:[%s0] sm:$0xf]
  %v13 = vld [vmem:[%s0 + $0x4] sm:$0xf]
  %v14 = vld [vmem:[%s0 + $0x8] sm:$0xf]
  %v15 = vld [vmem:[%s0 + $0xc] sm:$0xf]
  %v16 = vld [vmem:[%s0 + $0x10] sm:$0xf]
  %v17 = vld [vmem:[%s0 + $0x14] sm:$0xf]
  %v18 = vld [vmem:[%s0 + $0x18] sm:$0xf]
  %v19 = vld [vmem:[%s0 + $0x1c] sm:$0xf]
  %v20 = vld [vmem:[%s0 + $0x20] sm:$0xf]
  %v21 = vld [vmem:[%s0 + $0x24] sm:$0xf]
  %v22 = vld [vmem:[%s0 + $0x28] sm:$0xf]
  %v23 = vld [vmem:[%s0 + $0x2c] sm:$0xf]
  %v24 = vld [vmem:[%s0 + $0x30] sm:$0xf]
  %v25 = vld [vmem:[%s0 + $0x34] sm:$0xf]
  %v26 = vld [vmem:[%s0 + $0x38] sm:$0xf]
  %v27 = vld [vmem:[%s0 + $0x3c] sm:$0xf]
  %s28 = smul.u32 0, 128
  %s29 = sshra.s32 %s28, 3
  %s30 = sand.u32 %s28, 7
  %s31 = smul.addr %s29, 4
  %s32 = scalar_lea.vmem %s1, %s31
  %v33 = vld [vmem:[%s32] sm:$0xf]
  %v34 = vld [vmem:[%s32 + $0x4] sm:$0xf]
  %v35 = vld [vmem:[%s32 + $0x8] sm:$0xf]
  %v36 = vld [vmem:[%s32 + $0xc] sm:$0xf]
  %v37 = vld [vmem:[%s32 + $0x10] sm:$0xf]
  %v38 = vld [vmem:[%s32 + $0x14] sm:$0xf]
  %v39 = vld [vmem:[%s32 + $0x18] sm:$0xf]
  %v40 = vld [vmem:[%s32 + $0x1c] sm:$0xf]
  %v41 = vld [vmem:[%s32 + $0x20] sm:$0xf]
  %v42 = vld [vmem:[%s32 + $0x24] sm:$0xf]
  %v43 = vld [vmem:[%s32 + $0x28] sm:$0xf]
  %v44 = vld [vmem:[%s32 + $0x2c] sm:$0xf]
  %v45 = vld [vmem:[%s32 + $0x30] sm:$0xf]
  %v46 = vld [vmem:[%s32 + $0x34] sm:$0xf]
  %v47 = vld [vmem:[%s32 + $0x38] sm:$0xf]
  %v48 = vld [vmem:[%s32 + $0x3c] sm:$0xf]
  %v65 = vunpack.c.l.b16 %v12
  %v66 = vunpack.c.l.b16 %v13
  %v67 = vunpack.c.l.b16 %v14
  %v68 = vunpack.c.l.b16 %v15
  %v69 = vunpack.c.l.b16 %v16
  %v70 = vunpack.c.l.b16 %v17
  %v71 = vunpack.c.l.b16 %v18
  %v72 = vunpack.c.l.b16 %v19
  %v73 = vunpack.c.l.b16 %v20
  %v74 = vunpack.c.l.b16 %v21
  %v75 = vunpack.c.l.b16 %v22
  %v76 = vunpack.c.l.b16 %v23
  %v77 = vunpack.c.l.b16 %v24
  %v78 = vunpack.c.l.b16 %v25
  %v79 = vunpack.c.l.b16 %v26
  %v80 = vunpack.c.l.b16 %v27
  %v81 = vpack.c.b16 %v66, %v65
  %v82 = vpack.c.b16 %v68, %v67
  %v83 = vpack.c.b16 %v70, %v69
  %v84 = vpack.c.b16 %v72, %v71
  %v85 = vpack.c.b16 %v74, %v73
  %v86 = vpack.c.b16 %v76, %v75
  %v87 = vpack.c.b16 %v78, %v77
  %v88 = vpack.c.b16 %v80, %v79
  %v113 = vunpack.c.l.b16 %v33
  %v114 = vunpack.c.l.b16 %v34
  %v115 = vunpack.c.l.b16 %v35
  %v116 = vunpack.c.l.b16 %v36
  %v117 = vunpack.c.l.b16 %v37
  %v118 = vunpack.c.l.b16 %v38
  %v119 = vunpack.c.l.b16 %v39
  %v120 = vunpack.c.l.b16 %v40
  %v121 = vunpack.c.l.b16 %v41
  %v122 = vunpack.c.l.b16 %v42
  %v123 = vunpack.c.l.b16 %v43
  %v124 = vunpack.c.l.b16 %v44
  %v125 = vunpack.c.l.b16 %v45
  %v126 = vunpack.c.l.b16 %v46
  %v127 = vunpack.c.l.b16 %v47
  %v128 = vunpack.c.l.b16 %v48
  %v129 = vpack.c.b16 %v114, %v113
  %v130 = vpack.c.b16 %v116, %v115
  %v131 = vpack.c.b16 %v118, %v117
  %v132 = vpack.c.b16 %v120, %v119
  %v133 = vpack.c.b16 %v122, %v121
  %v134 = vpack.c.b16 %v124, %v123
  %v135 = vpack.c.b16 %v126, %v125
  %v136 = vpack.c.b16 %v128, %v127
  %145 = vmatprep.subr.bf16.mxu0 0
  %146 = vmatpush1.bf16.xpose.msra.mxu0 %v136
  %147 = vmatprep.subr.bf16.mxu0 0
  %148 = vmatpush1.bf16.xpose.msra.mxu0 %v135
  %149 = vmatprep.subr.bf16.mxu0 0
  %150 = vmatpush1.bf16.xpose.msra.mxu0 %v134
  %151 = vmatprep.subr.bf16.mxu0 0
  %152 = vmatpush1.bf16.xpose.msra.mxu0 %v133
  %153 = vmatprep.subr.bf16.mxu0 0
  %154 = vmatpush1.bf16.xpose.msra.mxu0 %v132
  %155 = vmatprep.subr.bf16.mxu0 0
  %156 = vmatpush1.bf16.xpose.msra.mxu0 %v131
  %157 = vmatprep.subr.bf16.mxu0 0
  %158 = vmatpush1.bf16.xpose.msra.mxu0 %v130
  %159 = vmatprep.subr.bf16.mxu0 0
  %160 = vmatpush1.bf16.xpose.msra.mxu0 %v129
  %161 = vmatprep.subr.bf16.mxu0 0
  %162 = vmatpush2.bf16.xpose.msra.mxu0 0
  %163 = vmatprep.subr.bf16.mxu0 0
  %164 = vmatpush2.bf16.xpose.msra.mxu0 0
  %165 = vmatprep.subr.bf16.mxu0 0
  %166 = vmatpush2.bf16.xpose.msra.mxu0 0
  %167 = vmatprep.subr.bf16.mxu0 0
  %168 = vmatpush2.bf16.xpose.msra.mxu0 0
  %169 = vmatprep.subr.bf16.mxu0 0
  %170 = vmatpush2.bf16.xpose.msra.mxu0 0
  %171 = vmatprep.subr.bf16.mxu0 0
  %172 = vmatpush2.bf16.xpose.msra.mxu0 0
  %173 = vmatprep.subr.bf16.mxu0 0
  %174 = vmatpush2.bf16.xpose.msra.mxu0 0
  %175 = vmatprep.subr.bf16.mxu0 0
  %176 = vmatpush2.bf16.xpose.msra.mxu0 0
  %177 = vmatprep.mubr.bf16.mxu0 0
  %178 = vmatmul.mubr.bf16.gmra.mxu0 %v81
  %v179 = vpop.f32.mrf.mxu0
  %v180 = vadd.f32 0.0, %v179
  %v181 = vpop.f32.mrf.mxu0
  %v182 = vpop.f32.mrf.mxu0
  %v183 = vadd.f32 0.0, %v182
  %v184 = vpop.f32.mrf.mxu0
  %185 = vmatprep.mubr.bf16.mxu0 0
  %186 = vmatmul.mubr.bf16.gmra.mxu0 %v82
  %v187 = vpop.f32.mrf.mxu0
  %v188 = vadd.f32 0.0, %v187
  %v189 = vpop.f32.mrf.mxu0
  %v190 = vpop.f32.mrf.mxu0
  %v191 = vadd.f32 0.0, %v190
  %v192 = vpop.f32.mrf.mxu0
  %193 = vmatprep.mubr.bf16.mxu0 0
  %194 = vmatmul.mubr.bf16.gmra.mxu0 %v83
  %v195 = vpop.f32.mrf.mxu0
  %v196 = vadd.f32 0.0, %v195
  %v197 = vpop.f32.mrf.mxu0
  %v198 = vpop.f32.mrf.mxu0
  %v199 = vadd.f32 0.0, %v198
  %v200 = vpop.f32.mrf.mxu0
  %201 = vmatprep.mubr.bf16.mxu0 0
  %202 = vmatmul.mubr.bf16.gmra.mxu0 %v84
  %v203 = vpop.f32.mrf.mxu0
  %v204 = vadd.f32 0.0, %v203
  %v205 = vpop.f32.mrf.mxu0
  %v206 = vpop.f32.mrf.mxu0
  %v207 = vadd.f32 0.0, %v206
  %v208 = vpop.f32.mrf.mxu0
  %209 = vmatprep.mubr.bf16.mxu0 0
  %210 = vmatmul.mubr.bf16.gmra.mxu0 %v85
  %v211 = vpop.f32.mrf.mxu0
  %v212 = vadd.f32 0.0, %v211
  %v213 = vpop.f32.mrf.mxu0
  %v214 = vpop.f32.mrf.mxu0
  %v215 = vadd.f32 0.0, %v214
  %v216 = vpop.f32.mrf.mxu0
  %217 = vmatprep.mubr.bf16.mxu0 0
  %218 = vmatmul.mubr.bf16.gmra.mxu0 %v86
  %v219 = vpop.f32.mrf.mxu0
  %v220 = vadd.f32 0.0, %v219
  %v221 = vpop.f32.mrf.mxu0
  %v222 = vpop.f32.mrf.mxu0
  %v223 = vadd.f32 0.0, %v222
  %v224 = vpop.f32.mrf.mxu0
  %225 = vmatprep.mubr.bf16.mxu0 0
  %226 = vmatmul.mubr.bf16.gmra.mxu0 %v87
  %v227 = vpop.f32.mrf.mxu0
  %v228 = vadd.f32 0.0, %v227
  %v229 = vpop.f32.mrf.mxu0
  %v230 = vpop.f32.mrf.mxu0
  %v231 = vadd.f32 0.0, %v230
  %v232 = vpop.f32.mrf.mxu0
  %233 = vmatprep.mubr.bf16.mxu0 0
  %234 = vmatmul.mubr.bf16.gmra.mxu0 %v88
  %v235 = vpop.f32.mrf.mxu0
  %v236 = vadd.f32 0.0, %v235
  %v237 = vpop.f32.mrf.mxu0
  %v238 = vpop.f32.mrf.mxu0
  %v239 = vadd.f32 0.0, %v238
  %v240 = vpop.f32.mrf.mxu0
  %241 = vdwg.mxu0
  %242 = vst [vmem:[%s2] sm:$0xff] %v180
  %243 = vst [vmem:[%s2 + $0x8] sm:$0xff] %v183
  %244 = vst [vmem:[%s2 + $0x10] sm:$0xff] %v188
  %245 = vst [vmem:[%s2 + $0x18] sm:$0xff] %v191
  %246 = vst [vmem:[%s2 + $0x20] sm:$0xff] %v196
  %247 = vst [vmem:[%s2 + $0x28] sm:$0xff] %v199
  %248 = vst [vmem:[%s2 + $0x30] sm:$0xff] %v204
  %249 = vst [vmem:[%s2 + $0x38] sm:$0xff] %v207
  %250 = vst [vmem:[%s2 + $0x40] sm:$0xff] %v212
  %251 = vst [vmem:[%s2 + $0x48] sm:$0xff] %v215
  %252 = vst [vmem:[%s2 + $0x50] sm:$0xff] %v220
  %253 = vst [vmem:[%s2 + $0x58] sm:$0xff] %v223
  %254 = vst [vmem:[%s2 + $0x60] sm:$0xff] %v228
  %255 = vst [vmem:[%s2 + $0x68] sm:$0xff] %v231
  %256 = vst [vmem:[%s2 + $0x70] sm:$0xff] %v236
  %257 = vst [vmem:[%s2 + $0x78] sm:$0xff] %v239
  // Predicated region
  $region10: #{regular_block_forward.3} parent=0 // pred_check
    _
  $region11: #{regular_block_forward.3} parent=0 // pred_check_branch
    %259 = sbr.rel (0) target = $region13
  $region12: #{regular_block_forward.3} parent=0 // pred_region
    _
  $region13: #{regular_block_forward.3} parent=0 // pred_fallthru
    _
  // Predicated region
  $region14: #{regular_block_forward.3} parent=0 // pred_check
    _
  $region15: #{regular_block_forward.3} parent=0 // pred_check_branch
    %261 = sbr.rel (0) target = $region17
  $region16: #{regular_block_forward.3} parent=0 // pred_region
    _
  $region17: #{regular_block_forward.3} parent=0 // pred_fallthru
    _

// kernel: regular_block_forward.2
$region0: #{regular_block_forward.2}
  #allocation0 [shape = 'u32[]', space=smem, size = 0x4, offset = 0x4, fixed_abs, tag = 'smem constant byte address 0x4 - core index']
  #allocation1 [shape = 'u32[144,128]{1,0:T(1,128)}', space=vmem, size = 0x12000, scoped, tag = 'internal scratch']
  %s0 = inlined_call_operand.vmem [shape: bf16[128,128], index: 0, kind: input, shape index: {}]
  %s1 = inlined_call_operand.vmem [shape: bf16[128,128], index: 1, kind: input, shape index: {}]
  %s2 = inlined_call_operand.vmem [shape: bf16[128,128], index: 2, kind: input, shape index: {}]
  %s3 = inlined_call_operand.vmem [shape: f32[1,128], index: 3, kind: input, shape index: {}]
  %s4 = inlined_call_operand.vmem [shape: f32[1,128], index: 4, kind: input, shape index: {}]
  %s5 = inlined_call_operand.vmem [shape: bf16[128,128], index: 5, kind: input, shape index: {}]
  %s6 = inlined_call_operand.vmem [shape: bf16[128,128], index: 6, kind: input, shape index: {}]
  %s7 = inlined_call_operand.vmem [shape: f32[1,128], index: 7, kind: input, shape index: {}]
  %s8 = inlined_call_operand.vmem [shape: f32[1,128], index: 8, kind: input, shape index: {}]
  %s9 = inlined_call_operand.vmem [shape: bf16[128,128], index: 9, kind: output, shape index: {0}]
  %s10 = inlined_call_operand.vmem [shape: bf16[128,128], index: 10, kind: output, shape index: {1}]
  %11 = xla_tuple %s9, %s10
  %s12 = sld [smem:[#allocation0]]
  $region54: #{regular_block_forward.2} parent=0
    _
  %s14 = ssub.s32 1, %s12
  %s15 = scalar_select 0, %s14, %s12
  // Predicated region
  $region2: #{regular_block_forward.2} parent=0 // pred_check
    _
  $region3: #{regular_block_forward.2} parent=0 // pred_check_branch
    %17 = sbr.rel (0) target = $region5
  $region4: #{regular_block_forward.2} parent=0 // pred_region
    _
  $region5: #{regular_block_forward.2} parent=0 // pred_fallthru
    _
  // Predicated region
  $region6: #{regular_block_forward.2} parent=0 // pred_check
    _
  $region7: #{regular_block_forward.2} parent=0 // pred_check_branch
    %19 = sbr.rel (0) target = $region9
  $region8: #{regular_block_forward.2} parent=0 // pred_region
    _
  $region9: #{regular_block_forward.2} parent=0 // pred_fallthru
    _
  // Predicated region
  $region10: #{regular_block_forward.2} parent=0 // pred_check
    _
  $region11: #{regular_block_forward.2} parent=0 // pred_check_branch
    %21 = sbr.rel (0) target = $region13
  $region12: #{regular_block_forward.2} parent=0 // pred_region
    _
  $region13: #{regular_block_forward.2} parent=0 // pred_fallthru
    _
  // Predicated region
  $region14: #{regular_block_forward.2} parent=0 // pred_check
    _
  $region15: #{regular_block_forward.2} parent=0 // pred_check_branch
    %23 = sbr.rel (0) target = $region17
  $region16: #{regular_block_forward.2} parent=0 // pred_region
    _
  $region17: #{regular_block_forward.2} parent=0 // pred_fallthru
    _
  // Predicated region
  $region18: #{regular_block_forward.2} parent=0 // pred_check
    _
  $region19: #{regular_block_forward.2} parent=0 // pred_check_branch
    %25 = sbr.rel (0) target = $region21
  $region20: #{regular_block_forward.2} parent=0 // pred_region
    _
  $region21: #{regular_block_forward.2} parent=0 // pred_fallthru
    _
  // Predicated region
  $region22: #{regular_block_forward.2} parent=0 // pred_check
    _
  $region23: #{regular_block_forward.2} parent=0 // pred_check_branch
    %27 = sbr.rel (0) target = $region25
  $region24: #{regular_block_forward.2} parent=0 // pred_region
    _
  $region25: #{regular_block_forward.2} parent=0 // pred_fallthru
    _
  // Predicated region
  $region26: #{regular_block_forward.2} parent=0 // pred_check
    _
  $region27: #{regular_block_forward.2} parent=0 // pred_check_branch
    %29 = sbr.rel (0) target = $region29
  $region28: #{regular_block_forward.2} parent=0 // pred_region
    _
  $region29: #{regular_block_forward.2} parent=0 // pred_fallthru
    _
  // Predicated region
  $region30: #{regular_block_forward.2} parent=0 // pred_check
    _
  $region31: #{regular_block_forward.2} parent=0 // pred_check_branch
    %31 = sbr.rel (0) target = $region33
  $region32: #{regular_block_forward.2} parent=0 // pred_region
    _
  $region33: #{regular_block_forward.2} parent=0 // pred_fallthru
    _
  // Predicated region
  $region34: #{regular_block_forward.2} parent=0 // pred_check
    _
  $region35: #{regular_block_forward.2} parent=0 // pred_check_branch
    %33 = sbr.rel (0) target = $region37
  $region36: #{regular_block_forward.2} parent=0 // pred_region
    _
  $region37: #{regular_block_forward.2} parent=0 // pred_fallthru
    _
  %v35 = vld [vmem:[%s0] sm:$0xf]
  %v36 = vld [vmem:[%s0 + $0x4] sm:$0xf]
  %v37 = vld [vmem:[%s0 + $0x8] sm:$0xf]
  %v38 = vld [vmem:[%s0 + $0xc] sm:$0xf]
  %v39 = vld [vmem:[%s0 + $0x10] sm:$0xf]
  %v40 = vld [vmem:[%s0 + $0x14] sm:$0xf]
  %v41 = vld [vmem:[%s0 + $0x18] sm:$0xf]
  %v42 = vld [vmem:[%s0 + $0x1c] sm:$0xf]
  %v43 = vld [vmem:[%s0 + $0x20] sm:$0xf]
  %v44 = vld [vmem:[%s0 + $0x24] sm:$0xf]
  %v45 = vld [vmem:[%s0 + $0x28] sm:$0xf]
  %v46 = vld [vmem:[%s0 + $0x2c] sm:$0xf]
  %v47 = vld [vmem:[%s0 + $0x30] sm:$0xf]
  %v48 = vld [vmem:[%s0 + $0x34] sm:$0xf]
  %v49 = vld [vmem:[%s0 + $0x38] sm:$0xf]
  %v50 = vld [vmem:[%s0 + $0x3c] sm:$0xf]
  %v51 = vld [vmem:[%s1] sm:$0xf]
  %v52 = vld [vmem:[%s1 + $0x4] sm:$0xf]
  %v53 = vld [vmem:[%s1 + $0x8] sm:$0xf]
  %v54 = vld [vmem:[%s1 + $0xc] sm:$0xf]
  %v55 = vld [vmem:[%s1 + $0x10] sm:$0xf]
  %v56 = vld [vmem:[%s1 + $0x14] sm:$0xf]
  %v57 = vld [vmem:[%s1 + $0x18] sm:$0xf]
  %v58 = vld [vmem:[%s1 + $0x1c] sm:$0xf]
  %v59 = vld [vmem:[%s1 + $0x20] sm:$0xf]
  %v60 = vld [vmem:[%s1 + $0x24] sm:$0xf]
  %v61 = vld [vmem:[%s1 + $0x28] sm:$0xf]
  %v62 = vld [vmem:[%s1 + $0x2c] sm:$0xf]
  %v63 = vld [vmem:[%s1 + $0x30] sm:$0xf]
  %v64 = vld [vmem:[%s1 + $0x34] sm:$0xf]
  %v65 = vld [vmem:[%s1 + $0x38] sm:$0xf]
  %v66 = vld [vmem:[%s1 + $0x3c] sm:$0xf]
  %v67 = vld [vmem:[%s3] sm:$0x1]
  %v69 = vlaneseq
  %v70 = vshrl.u32 %v69, 7
  %v71 = vsub.s32 0, %v70
  %v72 = vrot.slane %v67, %v71
  %v90 = vunpack.c.l.b16 %v35
  %v91 = vunpack.c.l.b16 %v36
  %v92 = vunpack.c.l.b16 %v37
  %v93 = vunpack.c.l.b16 %v38
  %v94 = vunpack.c.l.b16 %v39
  %v95 = vunpack.c.l.b16 %v40
  %v96 = vunpack.c.l.b16 %v41
  %v97 = vunpack.c.l.b16 %v42
  %v98 = vunpack.c.l.b16 %v43
  %v99 = vunpack.c.l.b16 %v44
  %v100 = vunpack.c.l.b16 %v45
  %v101 = vunpack.c.l.b16 %v46
  %v102 = vunpack.c.l.b16 %v47
  %v103 = vunpack.c.l.b16 %v48
  %v104 = vunpack.c.l.b16 %v49
  %v105 = vunpack.c.l.b16 %v50
  %v106 = vpack.c.b16 %v91, %v90
  %v107 = vpack.c.b16 %v93, %v92
  %v108 = vpack.c.b16 %v95, %v94
  %v109 = vpack.c.b16 %v97, %v96
  %v110 = vpack.c.b16 %v99, %v98
  %v111 = vpack.c.b16 %v101, %v100
  %v112 = vpack.c.b16 %v103, %v102
  %v113 = vpack.c.b16 %v105, %v104
  %v138 = vunpack.c.l.b16 %v51
  %v139 = vunpack.c.l.b16 %v52
  %v140 = vunpack.c.l.b16 %v53
  %v141 = vunpack.c.l.b16 %v54
  %v142 = vunpack.c.l.b16 %v55
  %v143 = vunpack.c.l.b16 %v56
  %v144 = vunpack.c.l.b16 %v57
  %v145 = vunpack.c.l.b16 %v58
  %v146 = vunpack.c.l.b16 %v59
  %v147 = vunpack.c.l.b16 %v60
  %v148 = vunpack.c.l.b16 %v61
  %v149 = vunpack.c.l.b16 %v62
  %v150 = vunpack.c.l.b16 %v63
  %v151 = vunpack.c.l.b16 %v64
  %v152 = vunpack.c.l.b16 %v65
  %v153 = vunpack.c.l.b16 %v66
  %v154 = vpack.c.b16 %v139, %v138
  %v155 = vpack.c.b16 %v141, %v140
  %v156 = vpack.c.b16 %v143, %v142
  %v157 = vpack.c.b16 %v145, %v144
  %v158 = vpack.c.b16 %v147, %v146
  %v159 = vpack.c.b16 %v149, %v148
  %v160 = vpack.c.b16 %v151, %v150
  %v161 = vpack.c.b16 %v153, %v152
  %170 = vmatprep.subr.bf16.mxu0 0
  %171 = vmatpush1.bf16.msra.mxu0 %v161
  %172 = vmatprep.subr.bf16.mxu0 0
  %173 = vmatpush1.bf16.msra.mxu0 %v160
  %174 = vmatprep.subr.bf16.mxu0 0
  %175 = vmatpush1.bf16.msra.mxu0 %v159
  %176 = vmatprep.subr.bf16.mxu0 0
  %177 = vmatpush1.bf16.msra.mxu0 %v158
  %178 = vmatprep.subr.bf16.mxu0 0
  %179 = vmatpush1.bf16.msra.mxu0 %v157
  %180 = vmatprep.subr.bf16.mxu0 0
  %181 = vmatpush1.bf16.msra.mxu0 %v156
  %182 = vmatprep.subr.bf16.mxu0 0
  %183 = vmatpush1.bf16.msra.mxu0 %v155
  %184 = vmatprep.subr.bf16.mxu0 0
  %185 = vmatpush1.bf16.msra.mxu0 %v154
  %186 = vmatprep.subr.bf16.mxu0 0
  %187 = vmatpush2.bf16.msra.mxu0 0
  %188 = vmatprep.subr.bf16.mxu0 0
  %189 = vmatpush2.bf16.msra.mxu0 0
  %190 = vmatprep.subr.bf16.mxu0 0
  %191 = vmatpush2.bf16.msra.mxu0 0
  %192 = vmatprep.subr.bf16.mxu0 0
  %193 = vmatpush2.bf16.msra.mxu0 0
  %194 = vmatprep.subr.bf16.mxu0 0
  %195 = vmatpush2.bf16.msra.mxu0 0
  %196 = vmatprep.subr.bf16.mxu0 0
  %197 = vmatpush2.bf16.msra.mxu0 0
  %198 = vmatprep.subr.bf16.mxu0 0
  %199 = vmatpush2.bf16.msra.mxu0 0
  %200 = vmatprep.subr.bf16.mxu0 0
  %201 = vmatpush2.bf16.msra.mxu0 0
  %202 = vmatprep.mubr.bf16.mxu0 0
  %203 = vmatmul.mubr.bf16.gmra.mxu0 %v106
  %v204 = vpop.f32.mrf.mxu0
  %v205 = vadd.f32 %v72, %v204
  %v206 = vpop.f32.mrf.mxu0
  %v207 = vpop.f32.mrf.mxu0
  %v208 = vadd.f32 %v72, %v207
  %v209 = vpop.f32.mrf.mxu0
  %210 = vmatprep.mubr.bf16.mxu0 0
  %211 = vmatmul.mubr.bf16.gmra.mxu0 %v107
  %v212 = vpop.f32.mrf.mxu0
  %v213 = vadd.f32 %v72, %v212
  %v214 = vpop.f32.mrf.mxu0
  %v215 = vpop.f32.mrf.mxu0
  %v216 = vadd.f32 %v72, %v215
  %v217 = vpop.f32.mrf.mxu0
  %218 = vmatprep.mubr.bf16.mxu0 0
  %219 = vmatmul.mubr.bf16.gmra.mxu0 %v108
  %v220 = vpop.f32.mrf.mxu0
  %v221 = vadd.f32 %v72, %v220
  %v222 = vpop.f32.mrf.mxu0
  %v223 = vpop.f32.mrf.mxu0
  %v224 = vadd.f32 %v72, %v223
  %v225 = vpop.f32.mrf.mxu0
  %226 = vmatprep.mubr.bf16.mxu0 0
  %227 = vmatmul.mubr.bf16.gmra.mxu0 %v109
  %v228 = vpop.f32.mrf.mxu0
  %v229 = vadd.f32 %v72, %v228
  %v230 = vpop.f32.mrf.mxu0
  %v231 = vpop.f32.mrf.mxu0
  %v232 = vadd.f32 %v72, %v231
  %v233 = vpop.f32.mrf.mxu0
  %234 = vmatprep.mubr.bf16.mxu0 0
  %235 = vmatmul.mubr.bf16.gmra.mxu0 %v110
  %v236 = vpop.f32.mrf.mxu0
  %v237 = vadd.f32 %v72, %v236
  %v238 = vpop.f32.mrf.mxu0
  %v239 = vpop.f32.mrf.mxu0
  %v240 = vadd.f32 %v72, %v239
  %v241 = vpop.f32.mrf.mxu0
  %242 = vmatprep.mubr.bf16.mxu0 0
  %243 = vmatmul.mubr.bf16.gmra.mxu0 %v111
  %v244 = vpop.f32.mrf.mxu0
  %v245 = vadd.f32 %v72, %v244
  %v246 = vpop.f32.mrf.mxu0
  %v247 = vpop.f32.mrf.mxu0
  %v248 = vadd.f32 %v72, %v247
  %v249 = vpop.f32.mrf.mxu0
  %250 = vmatprep.mubr.bf16.mxu0 0
  %251 = vmatmul.mubr.bf16.gmra.mxu0 %v112
  %v252 = vpop.f32.mrf.mxu0
  %v253 = vadd.f32 %v72, %v252
  %v254 = vpop.f32.mrf.mxu0
  %v255 = vpop.f32.mrf.mxu0
  %v256 = vadd.f32 %v72, %v255
  %v257 = vpop.f32.mrf.mxu0
  %258 = vmatprep.mubr.bf16.mxu0 0
  %259 = vmatmul.mubr.bf16.gmra.mxu0 %v113
  %v260 = vpop.f32.mrf.mxu0
  %v261 = vadd.f32 %v72, %v260
  %v262 = vpop.f32.mrf.mxu0
  %v263 = vpop.f32.mrf.mxu0
  %v264 = vadd.f32 %v72, %v263
  %v265 = vpop.f32.mrf.mxu0
  %266 = vdwg.mxu0
  %v267 = vmax.f32 %v205, 0.0
  %v268 = vmax.f32 %v208, 0.0
  %v269 = vmax.f32 %v213, 0.0
  %v270 = vmax.f32 %v216, 0.0
  %v271 = vmax.f32 %v221, 0.0
  %v272 = vmax.f32 %v224, 0.0
  %v273 = vmax.f32 %v229, 0.0
  %v274 = vmax.f32 %v232, 0.0
  %v275 = vmax.f32 %v237, 0.0
  %v276 = vmax.f32 %v240, 0.0
  %v277 = vmax.f32 %v245, 0.0
  %v278 = vmax.f32 %v248, 0.0
  %v279 = vmax.f32 %v253, 0.0
  %v280 = vmax.f32 %v256, 0.0
  %v281 = vmax.f32 %v261, 0.0
  %v282 = vmax.f32 %v264, 0.0
  %v283 = vpack.c.bf16 %v268, %v267
  %v284 = vpack.c.bf16 %v270, %v269
  %v285 = vpack.c.bf16 %v272, %v271
  %v286 = vpack.c.bf16 %v274, %v273
  %v287 = vpack.c.bf16 %v276, %v275
  %v288 = vpack.c.bf16 %v278, %v277
  %v289 = vpack.c.bf16 %v280, %v279
  %v290 = vpack.c.bf16 %v282, %v281
  %v291 = vld [vmem:[%s2] sm:$0xf]
  %v292 = vld [vmem:[%s2 + $0x4] sm:$0xf]
  %v293 = vld [vmem:[%s2 + $0x8] sm:$0xf]
  %v294 = vld [vmem:[%s2 + $0xc] sm:$0xf]
  %v295 = vld [vmem:[%s2 + $0x10] sm:$0xf]
  %v296 = vld [vmem:[%s2 + $0x14] sm:$0xf]
  %v297 = vld [vmem:[%s2 + $0x18] sm:$0xf]
  %v298 = vld [vmem:[%s2 + $0x1c] sm:$0xf]
  %v299 = vld [vmem:[%s2 + $0x20] sm:$0xf]
  %v300 = vld [vmem:[%s2 + $0x24] sm:$0xf]
  %v301 = vld [vmem:[%s2 + $0x28] sm:$0xf]
  %v302 = vld [vmem:[%s2 + $0x2c] sm:$0xf]
  %v303 = vld [vmem:[%s2 + $0x30] sm:$0xf]
  %v304 = vld [vmem:[%s2 + $0x34] sm:$0xf]
  %v305 = vld [vmem:[%s2 + $0x38] sm:$0xf]
  %v306 = vld [vmem:[%s2 + $0x3c] sm:$0xf]
  %v307 = vld [vmem:[%s4] sm:$0x1]
  %v309 = vlaneseq
  %v310 = vshrl.u32 %v309, 7
  %v311 = vsub.s32 0, %v310
  %v312 = vrot.slane %v307, %v311
  %v330 = vunpack.c.l.b16 %v291
  %v331 = vunpack.c.l.b16 %v292
  %v332 = vunpack.c.l.b16 %v293
  %v333 = vunpack.c.l.b16 %v294
  %v334 = vunpack.c.l.b16 %v295
  %v335 = vunpack.c.l.b16 %v296
  %v336 = vunpack.c.l.b16 %v297
  %v337 = vunpack.c.l.b16 %v298
  %v338 = vunpack.c.l.b16 %v299
  %v339 = vunpack.c.l.b16 %v300
  %v340 = vunpack.c.l.b16 %v301
  %v341 = vunpack.c.l.b16 %v302
  %v342 = vunpack.c.l.b16 %v303
  %v343 = vunpack.c.l.b16 %v304
  %v344 = vunpack.c.l.b16 %v305
  %v345 = vunpack.c.l.b16 %v306
  %v346 = vpack.c.b16 %v331, %v330
  %v347 = vpack.c.b16 %v333, %v332
  %v348 = vpack.c.b16 %v335, %v334
  %v349 = vpack.c.b16 %v337, %v336
  %v350 = vpack.c.b16 %v339, %v338
  %v351 = vpack.c.b16 %v341, %v340
  %v352 = vpack.c.b16 %v343, %v342
  %v353 = vpack.c.b16 %v345, %v344
  %362 = vmatprep.subr.bf16.mxu0 0
  %363 = vmatpush1.bf16.msra.mxu0 %v353
  %364 = vmatprep.subr.bf16.mxu0 0
  %365 = vmatpush1.bf16.msra.mxu0 %v352
  %366 = vmatprep.subr.bf16.mxu0 0
  %367 = vmatpush1.bf16.msra.mxu0 %v351
  %368 = vmatprep.subr.bf16.mxu0 0
  %369 = vmatpush1.bf16.msra.mxu0 %v350
  %370 = vmatprep.subr.bf16.mxu0 0
  %371 = vmatpush1.bf16.msra.mxu0 %v349
  %372 = vmatprep.subr.bf16.mxu0 0
  %373 = vmatpush1.bf16.msra.mxu0 %v348
  %374 = vmatprep.subr.bf16.mxu0 0
  %375 = vmatpush1.bf16.msra.mxu0 %v347
  %376 = vmatprep.subr.bf16.mxu0 0
  %377 = vmatpush1.bf16.msra.mxu0 %v346
  %378 = vmatprep.subr.bf16.mxu0 0
  %379 = vmatpush2.bf16.msra.mxu0 0
  %380 = vmatprep.subr.bf16.mxu0 0
  %381 = vmatpush2.bf16.msra.mxu0 0
  %382 = vmatprep.subr.bf16.mxu0 0
  %383 = vmatpush2.bf16.msra.mxu0 0
  %384 = vmatprep.subr.bf16.mxu0 0
  %385 = vmatpush2.bf16.msra.mxu0 0
  %386 = vmatprep.subr.bf16.mxu0 0
  %387 = vmatpush2.bf16.msra.mxu0 0
  %388 = vmatprep.subr.bf16.mxu0 0
  %389 = vmatpush2.bf16.msra.mxu0 0
  %390 = vmatprep.subr.bf16.mxu0 0
  %391 = vmatpush2.bf16.msra.mxu0 0
  %392 = vmatprep.subr.bf16.mxu0 0
  %393 = vmatpush2.bf16.msra.mxu0 0
  %394 = vmatprep.mubr.bf16.mxu0 0
  %395 = vmatmul.mubr.bf16.gmra.mxu0 %v283
  %v396 = vpop.f32.mrf.mxu0
  %v397 = vadd.f32 %v312, %v396
  %v398 = vpop.f32.mrf.mxu0
  %v399 = vpop.f32.mrf.mxu0
  %v400 = vadd.f32 %v312, %v399
  %v401 = vpop.f32.mrf.mxu0
  %402 = vmatprep.mubr.bf16.mxu0 0
  %403 = vmatmul.mubr.bf16.gmra.mxu0 %v284
  %v404 = vpop.f32.mrf.mxu0
  %v405 = vadd.f32 %v312, %v404
  %v406 = vpop.f32.mrf.mxu0
  %v407 = vpop.f32.mrf.mxu0
  %v408 = vadd.f32 %v312, %v407
  %v409 = vpop.f32.mrf.mxu0
  %410 = vmatprep.mubr.bf16.mxu0 0
  %411 = vmatmul.mubr.bf16.gmra.mxu0 %v285
  %v412 = vpop.f32.mrf.mxu0
  %v413 = vadd.f32 %v312, %v412
  %v414 = vpop.f32.mrf.mxu0
  %v415 = vpop.f32.mrf.mxu0
  %v416 = vadd.f32 %v312, %v415
  %v417 = vpop.f32.mrf.mxu0
  %418 = vmatprep.mubr.bf16.mxu0 0
  %419 = vmatmul.mubr.bf16.gmra.mxu0 %v286
  %v420 = vpop.f32.mrf.mxu0
  %v421 = vadd.f32 %v312, %v420
  %v422 = vpop.f32.mrf.mxu0
  %v423 = vpop.f32.mrf.mxu0
  %v424 = vadd.f32 %v312, %v423
  %v425 = vpop.f32.mrf.mxu0
  %426 = vmatprep.mubr.bf16.mxu0 0
  %427 = vmatmul.mubr.bf16.gmra.mxu0 %v287
  %v428 = vpop.f32.mrf.mxu0
  %v429 = vadd.f32 %v312, %v428
  %v430 = vpop.f32.mrf.mxu0
  %v431 = vpop.f32.mrf.mxu0
  %v432 = vadd.f32 %v312, %v431
  %v433 = vpop.f32.mrf.mxu0
  %434 = vmatprep.mubr.bf16.mxu0 0
  %435 = vmatmul.mubr.bf16.gmra.mxu0 %v288
  %v436 = vpop.f32.mrf.mxu0
  %v437 = vadd.f32 %v312, %v436
  %v438 = vpop.f32.mrf.mxu0
  %v439 = vpop.f32.mrf.mxu0
  %v440 = vadd.f32 %v312, %v439
  %v441 = vpop.f32.mrf.mxu0
  %442 = vmatprep.mubr.bf16.mxu0 0
  %443 = vmatmul.mubr.bf16.gmra.mxu0 %v289
  %v444 = vpop.f32.mrf.mxu0
  %v445 = vadd.f32 %v312, %v444
  %v446 = vpop.f32.mrf.mxu0
  %v447 = vpop.f32.mrf.mxu0
  %v448 = vadd.f32 %v312, %v447
  %v449 = vpop.f32.mrf.mxu0
  %450 = vmatprep.mubr.bf16.mxu0 0
  %451 = vmatmul.mubr.bf16.gmra.mxu0 %v290
  %v452 = vpop.f32.mrf.mxu0
  %v453 = vadd.f32 %v312, %v452
  %v454 = vpop.f32.mrf.mxu0
  %v455 = vpop.f32.mrf.mxu0
  %v456 = vadd.f32 %v312, %v455
  %v457 = vpop.f32.mrf.mxu0
  %458 = vdwg.mxu0
  %v459 = vmax.f32 %v397, 0.0
  %v460 = vmax.f32 %v400, 0.0
  %v461 = vmax.f32 %v405, 0.0
  %v462 = vmax.f32 %v408, 0.0
  %v463 = vmax.f32 %v413, 0.0
  %v464 = vmax.f32 %v416, 0.0
  %v465 = vmax.f32 %v421, 0.0
  %v466 = vmax.f32 %v424, 0.0
  %v467 = vmax.f32 %v429, 0.0
  %v468 = vmax.f32 %v432, 0.0
  %v469 = vmax.f32 %v437, 0.0
  %v470 = vmax.f32 %v440, 0.0
  %v471 = vmax.f32 %v445, 0.0
  %v472 = vmax.f32 %v448, 0.0
  %v473 = vmax.f32 %v453, 0.0
  %v474 = vmax.f32 %v456, 0.0
  %v475 = vpack.c.bf16 %v460, %v459
  %v476 = vpack.c.bf16 %v462, %v461
  %v477 = vpack.c.bf16 %v464, %v463
  %v478 = vpack.c.bf16 %v466, %v465
  %v479 = vpack.c.bf16 %v468, %v467
  %v480 = vpack.c.bf16 %v470, %v469
  %v481 = vpack.c.bf16 %v472, %v471
  %v482 = vpack.c.bf16 %v474, %v473
  %v491 = vunpack.c.l.b16 %v475
  %v492 = vunpack.c.h.b16 %v475
  %v493 = vunpack.c.l.b16 %v476
  %v494 = vunpack.c.h.b16 %v476
  %v495 = vunpack.c.l.b16 %v477
  %v496 = vunpack.c.h.b16 %v477
  %v497 = vunpack.c.l.b16 %v478
  %v498 = vunpack.c.h.b16 %v478
  %v499 = vunpack.c.l.b16 %v479
  %v500 = vunpack.c.h.b16 %v479
  %v501 = vunpack.c.l.b16 %v480
  %v502 = vunpack.c.h.b16 %v480
  %v503 = vunpack.c.l.b16 %v481
  %v504 = vunpack.c.h.b16 %v481
  %v505 = vunpack.c.l.b16 %v482
  %v506 = vunpack.c.h.b16 %v482
  %v507 = vpack.c.b16 %v491, %v491
  %v508 = vpack.c.b16 %v492, %v492
  %v509 = vpack.c.b16 %v493, %v493
  %v510 = vpack.c.b16 %v494, %v494
  %v511 = vpack.c.b16 %v495, %v495
  %v512 = vpack.c.b16 %v496, %v496
  %v513 = vpack.c.b16 %v497, %v497
  %v514 = vpack.c.b16 %v498, %v498
  %v515 = vpack.c.b16 %v499, %v499
  %v516 = vpack.c.b16 %v500, %v500
  %v517 = vpack.c.b16 %v501, %v501
  %v518 = vpack.c.b16 %v502, %v502
  %v519 = vpack.c.b16 %v503, %v503
  %v520 = vpack.c.b16 %v504, %v504
  %v521 = vpack.c.b16 %v505, %v505
  %v522 = vpack.c.b16 %v506, %v506
  %539 = vst [vmem:[%s9] sm:$0xf] %v507
  %540 = vst [vmem:[%s9 + $0x4] sm:$0xf] %v508
  %541 = vst [vmem:[%s9 + $0x8] sm:$0xf] %v509
  %542 = vst [vmem:[%s9 + $0xc] sm:$0xf] %v510
  %543 = vst [vmem:[%s9 + $0x10] sm:$0xf] %v511
  %544 = vst [vmem:[%s9 + $0x14] sm:$0xf] %v512
  %545 = vst [vmem:[%s9 + $0x18] sm:$0xf] %v513
  %546 = vst [vmem:[%s9 + $0x1c] sm:$0xf] %v514
  %547 = vst [vmem:[%s9 + $0x20] sm:$0xf] %v515
  %548 = vst [vmem:[%s9 + $0x24] sm:$0xf] %v516
  %549 = vst [vmem:[%s9 + $0x28] sm:$0xf] %v517
  %550 = vst [vmem:[%s9 + $0x2c] sm:$0xf] %v518
  %551 = vst [vmem:[%s9 + $0x30] sm:$0xf] %v519
  %552 = vst [vmem:[%s9 + $0x34] sm:$0xf] %v520
  %553 = vst [vmem:[%s9 + $0x38] sm:$0xf] %v521
  %554 = vst [vmem:[%s9 + $0x3c] sm:$0xf] %v522
  %v555 = vld [vmem:[%s5] sm:$0xf]
  %v556 = vld [vmem:[%s5 + $0x4] sm:$0xf]
  %v557 = vld [vmem:[%s5 + $0x8] sm:$0xf]
  %v558 = vld [vmem:[%s5 + $0xc] sm:$0xf]
  %v559 = vld [vmem:[%s5 + $0x10] sm:$0xf]
  %v560 = vld [vmem:[%s5 + $0x14] sm:$0xf]
  %v561 = vld [vmem:[%s5 + $0x18] sm:$0xf]
  %v562 = vld [vmem:[%s5 + $0x1c] sm:$0xf]
  %v563 = vld [vmem:[%s5 + $0x20] sm:$0xf]
  %v564 = vld [vmem:[%s5 + $0x24] sm:$0xf]
  %v565 = vld [vmem:[%s5 + $0x28] sm:$0xf]
  %v566 = vld [vmem:[%s5 + $0x2c] sm:$0xf]
  %v567 = vld [vmem:[%s5 + $0x30] sm:$0xf]
  %v568 = vld [vmem:[%s5 + $0x34] sm:$0xf]
  %v569 = vld [vmem:[%s5 + $0x38] sm:$0xf]
  %v570 = vld [vmem:[%s5 + $0x3c] sm:$0xf]
  %v571 = vld [vmem:[%s7] sm:$0x1]
  %v573 = vlaneseq
  %v574 = vshrl.u32 %v573, 7
  %v575 = vsub.s32 0, %v574
  %v576 = vrot.slane %v571, %v575
  %v594 = vunpack.c.l.b16 %v555
  %v595 = vunpack.c.l.b16 %v556
  %v596 = vunpack.c.l.b16 %v557
  %v597 = vunpack.c.l.b16 %v558
  %v598 = vunpack.c.l.b16 %v559
  %v599 = vunpack.c.l.b16 %v560
  %v600 = vunpack.c.l.b16 %v561
  %v601 = vunpack.c.l.b16 %v562
  %v602 = vunpack.c.l.b16 %v563
  %v603 = vunpack.c.l.b16 %v564
  %v604 = vunpack.c.l.b16 %v565
  %v605 = vunpack.c.l.b16 %v566
  %v606 = vunpack.c.l.b16 %v567
  %v607 = vunpack.c.l.b16 %v568
  %v608 = vunpack.c.l.b16 %v569
  %v609 = vunpack.c.l.b16 %v570
  %v610 = vpack.c.b16 %v595, %v594
  %v611 = vpack.c.b16 %v597, %v596
  %v612 = vpack.c.b16 %v599, %v598
  %v613 = vpack.c.b16 %v601, %v600
  %v614 = vpack.c.b16 %v603, %v602
  %v615 = vpack.c.b16 %v605, %v604
  %v616 = vpack.c.b16 %v607, %v606
  %v617 = vpack.c.b16 %v609, %v608
  %626 = vmatprep.subr.bf16.mxu0 0
  %627 = vmatpush1.bf16.msra.mxu0 %v617
  %628 = vmatprep.subr.bf16.mxu0 0
  %629 = vmatpush1.bf16.msra.mxu0 %v616
  %630 = vmatprep.subr.bf16.mxu0 0
  %631 = vmatpush1.bf16.msra.mxu0 %v615
  %632 = vmatprep.subr.bf16.mxu0 0
  %633 = vmatpush1.bf16.msra.mxu0 %v614
  %634 = vmatprep.subr.bf16.mxu0 0
  %635 = vmatpush1.bf16.msra.mxu0 %v613
  %636 = vmatprep.subr.bf16.mxu0 0
  %637 = vmatpush1.bf16.msra.mxu0 %v612
  %638 = vmatprep.subr.bf16.mxu0 0
  %639 = vmatpush1.bf16.msra.mxu0 %v611
  %640 = vmatprep.subr.bf16.mxu0 0
  %641 = vmatpush1.bf16.msra.mxu0 %v610
  %642 = vmatprep.subr.bf16.mxu0 0
  %643 = vmatpush2.bf16.msra.mxu0 0
  %644 = vmatprep.subr.bf16.mxu0 0
  %645 = vmatpush2.bf16.msra.mxu0 0
  %646 = vmatprep.subr.bf16.mxu0 0
  %647 = vmatpush2.bf16.msra.mxu0 0
  %648 = vmatprep.subr.bf16.mxu0 0
  %649 = vmatpush2.bf16.msra.mxu0 0
  %650 = vmatprep.subr.bf16.mxu0 0
  %651 = vmatpush2.bf16.msra.mxu0 0
  %652 = vmatprep.subr.bf16.mxu0 0
  %653 = vmatpush2.bf16.msra.mxu0 0
  %654 = vmatprep.subr.bf16.mxu0 0
  %655 = vmatpush2.bf16.msra.mxu0 0
  %656 = vmatprep.subr.bf16.mxu0 0
  %657 = vmatpush2.bf16.msra.mxu0 0
  %658 = vmatprep.mubr.bf16.mxu0 0
  %659 = vmatmul.mubr.bf16.gmra.mxu0 %v106
  %v660 = vpop.f32.mrf.mxu0
  %v661 = vadd.f32 %v576, %v660
  %v662 = vpop.f32.mrf.mxu0
  %v663 = vpop.f32.mrf.mxu0
  %v664 = vadd.f32 %v576, %v663
  %v665 = vpop.f32.mrf.mxu0
  %666 = vmatprep.mubr.bf16.mxu0 0
  %667 = vmatmul.mubr.bf16.gmra.mxu0 %v107
  %v668 = vpop.f32.mrf.mxu0
  %v669 = vadd.f32 %v576, %v668
  %v670 = vpop.f32.mrf.mxu0
  %v671 = vpop.f32.mrf.mxu0
  %v672 = vadd.f32 %v576, %v671
  %v673 = vpop.f32.mrf.mxu0
  %674 = vmatprep.mubr.bf16.mxu0 0
  %675 = vmatmul.mubr.bf16.gmra.mxu0 %v108
  %v676 = vpop.f32.mrf.mxu0
  %v677 = vadd.f32 %v576, %v676
  %v678 = vpop.f32.mrf.mxu0
  %v679 = vpop.f32.mrf.mxu0
  %v680 = vadd.f32 %v576, %v679
  %v681 = vpop.f32.mrf.mxu0
  %682 = vmatprep.mubr.bf16.mxu0 0
  %683 = vmatmul.mubr.bf16.gmra.mxu0 %v109
  %v684 = vpop.f32.mrf.mxu0
  %v685 = vadd.f32 %v576, %v684
  %v686 = vpop.f32.mrf.mxu0
  %v687 = vpop.f32.mrf.mxu0
  %v688 = vadd.f32 %v576, %v687
  %v689 = vpop.f32.mrf.mxu0
  %690 = vmatprep.mubr.bf16.mxu0 0
  %691 = vmatmul.mubr.bf16.gmra.mxu0 %v110
  %v692 = vpop.f32.mrf.mxu0
  %v693 = vadd.f32 %v576, %v692
  %v694 = vpop.f32.mrf.mxu0
  %v695 = vpop.f32.mrf.mxu0
  %v696 = vadd.f32 %v576, %v695
  %v697 = vpop.f32.mrf.mxu0
  %698 = vmatprep.mubr.bf16.mxu0 0
  %699 = vmatmul.mubr.bf16.gmra.mxu0 %v111
  %v700 = vpop.f32.mrf.mxu0
  %v701 = vadd.f32 %v576, %v700
  %v702 = vpop.f32.mrf.mxu0
  %v703 = vpop.f32.mrf.mxu0
  %v704 = vadd.f32 %v576, %v703
  %v705 = vpop.f32.mrf.mxu0
  %706 = vmatprep.mubr.bf16.mxu0 0
  %707 = vmatmul.mubr.bf16.gmra.mxu0 %v112
  %v708 = vpop.f32.mrf.mxu0
  %v709 = vadd.f32 %v576, %v708
  %v710 = vpop.f32.mrf.mxu0
  %v711 = vpop.f32.mrf.mxu0
  %v712 = vadd.f32 %v576, %v711
  %v713 = vpop.f32.mrf.mxu0
  %714 = vmatprep.mubr.bf16.mxu0 0
  %715 = vmatmul.mubr.bf16.gmra.mxu0 %v113
  %v716 = vpop.f32.mrf.mxu0
  %v717 = vadd.f32 %v576, %v716
  %v718 = vpop.f32.mrf.mxu0
  %v719 = vpop.f32.mrf.mxu0
  %v720 = vadd.f32 %v576, %v719
  %v721 = vpop.f32.mrf.mxu0
  %722 = vdwg.mxu0
  %v723 = vmax.f32 %v661, 0.0
  %v724 = vmax.f32 %v664, 0.0
  %v725 = vmax.f32 %v669, 0.0
  %v726 = vmax.f32 %v672, 0.0
  %v727 = vmax.f32 %v677, 0.0
  %v728 = vmax.f32 %v680, 0.0
  %v729 = vmax.f32 %v685, 0.0
  %v730 = vmax.f32 %v688, 0.0
  %v731 = vmax.f32 %v693, 0.0
  %v732 = vmax.f32 %v696, 0.0
  %v733 = vmax.f32 %v701, 0.0
  %v734 = vmax.f32 %v704, 0.0
  %v735 = vmax.f32 %v709, 0.0
  %v736 = vmax.f32 %v712, 0.0
  %v737 = vmax.f32 %v717, 0.0
  %v738 = vmax.f32 %v720, 0.0
  %v739 = vpack.c.bf16 %v724, %v723
  %v740 = vpack.c.bf16 %v726, %v725
  %v741 = vpack.c.bf16 %v728, %v727
  %v742 = vpack.c.bf16 %v730, %v729
  %v743 = vpack.c.bf16 %v732, %v731
  %v744 = vpack.c.bf16 %v734, %v733
  %v745 = vpack.c.bf16 %v736, %v735
  %v746 = vpack.c.bf16 %v738, %v737
  %v747 = vld [vmem:[%s6] sm:$0xf]
  %v748 = vld [vmem:[%s6 + $0x4] sm:$0xf]
  %v749 = vld [vmem:[%s6 + $0x8] sm:$0xf]
  %v750 = vld [vmem:[%s6 + $0xc] sm:$0xf]
  %v751 = vld [vmem:[%s6 + $0x10] sm:$0xf]
  %v752 = vld [vmem:[%s6 + $0x14] sm:$0xf]
  %v753 = vld [vmem:[%s6 + $0x18] sm:$0xf]
  %v754 = vld [vmem:[%s6 + $0x1c] sm:$0xf]
  %v755 = vld [vmem:[%s6 + $0x20] sm:$0xf]
  %v756 = vld [vmem:[%s6 + $0x24] sm:$0xf]
  %v757 = vld [vmem:[%s6 + $0x28] sm:$0xf]
  %v758 = vld [vmem:[%s6 + $0x2c] sm:$0xf]
  %v759 = vld [vmem:[%s6 + $0x30] sm:$0xf]
  %v760 = vld [vmem:[%s6 + $0x34] sm:$0xf]
  %v761 = vld [vmem:[%s6 + $0x38] sm:$0xf]
  %v762 = vld [vmem:[%s6 + $0x3c] sm:$0xf]
  %v763 = vld [vmem:[%s8] sm:$0x1]
  %v765 = vlaneseq
  %v766 = vshrl.u32 %v765, 7
  %v767 = vsub.s32 0, %v766
  %v768 = vrot.slane %v763, %v767
  %v786 = vunpack.c.l.b16 %v747
  %v787 = vunpack.c.l.b16 %v748
  %v788 = vunpack.c.l.b16 %v749
  %v789 = vunpack.c.l.b16 %v750
  %v790 = vunpack.c.l.b16 %v751
  %v791 = vunpack.c.l.b16 %v752
  %v792 = vunpack.c.l.b16 %v753
  %v793 = vunpack.c.l.b16 %v754
  %v794 = vunpack.c.l.b16 %v755
  %v795 = vunpack.c.l.b16 %v756
  %v796 = vunpack.c.l.b16 %v757
  %v797 = vunpack.c.l.b16 %v758
  %v798 = vunpack.c.l.b16 %v759
  %v799 = vunpack.c.l.b16 %v760
  %v800 = vunpack.c.l.b16 %v761
  %v801 = vunpack.c.l.b16 %v762
  %v802 = vpack.c.b16 %v787, %v786
  %v803 = vpack.c.b16 %v789, %v788
  %v804 = vpack.c.b16 %v791, %v790
  %v805 = vpack.c.b16 %v793, %v792
  %v806 = vpack.c.b16 %v795, %v794
  %v807 = vpack.c.b16 %v797, %v796
  %v808 = vpack.c.b16 %v799, %v798
  %v809 = vpack.c.b16 %v801, %v800
  %818 = vmatprep.subr.bf16.mxu0 0
  %819 = vmatpush1.bf16.msra.mxu0 %v809
  %820 = vmatprep.subr.bf16.mxu0 0
  %821 = vmatpush1.bf16.msra.mxu0 %v808
  %822 = vmatprep.subr.bf16.mxu0 0
  %823 = vmatpush1.bf16.msra.mxu0 %v807
  %824 = vmatprep.subr.bf16.mxu0 0
  %825 = vmatpush1.bf16.msra.mxu0 %v806
  %826 = vmatprep.subr.bf16.mxu0 0
  %827 = vmatpush1.bf16.msra.mxu0 %v805
  %828 = vmatprep.subr.bf16.mxu0 0
  %829 = vmatpush1.bf16.msra.mxu0 %v804
  %830 = vmatprep.subr.bf16.mxu0 0
  %831 = vmatpush1.bf16.msra.mxu0 %v803
  %832 = vmatprep.subr.bf16.mxu0 0
  %833 = vmatpush1.bf16.msra.mxu0 %v802
  %834 = vmatprep.subr.bf16.mxu0 0
  %835 = vmatpush2.bf16.msra.mxu0 0
  %836 = vmatprep.subr.bf16.mxu0 0
  %837 = vmatpush2.bf16.msra.mxu0 0
  %838 = vmatprep.subr.bf16.mxu0 0
  %839 = vmatpush2.bf16.msra.mxu0 0
  %840 = vmatprep.subr.bf16.mxu0 0
  %841 = vmatpush2.bf16.msra.mxu0 0
  %842 = vmatprep.subr.bf16.mxu0 0
  %843 = vmatpush2.bf16.msra.mxu0 0
  %844 = vmatprep.subr.bf16.mxu0 0
  %845 = vmatpush2.bf16.msra.mxu0 0
  %846 = vmatprep.subr.bf16.mxu0 0
  %847 = vmatpush2.bf16.msra.mxu0 0
  %848 = vmatprep.subr.bf16.mxu0 0
  %849 = vmatpush2.bf16.msra.mxu0 0
  %850 = vmatprep.mubr.bf16.mxu0 0
  %851 = vmatmul.mubr.bf16.gmra.mxu0 %v739
  %v852 = vpop.f32.mrf.mxu0
  %v853 = vadd.f32 %v768, %v852
  %v854 = vpop.f32.mrf.mxu0
  %v855 = vpop.f32.mrf.mxu0
  %v856 = vadd.f32 %v768, %v855
  %v857 = vpop.f32.mrf.mxu0
  %858 = vmatprep.mubr.bf16.mxu0 0
  %859 = vmatmul.mubr.bf16.gmra.mxu0 %v740
  %v860 = vpop.f32.mrf.mxu0
  %v861 = vadd.f32 %v768, %v860
  %v862 = vpop.f32.mrf.mxu0
  %v863 = vpop.f32.mrf.mxu0
  %v864 = vadd.f32 %v768, %v863
  %v865 = vpop.f32.mrf.mxu0
  %866 = vmatprep.mubr.bf16.mxu0 0
  %867 = vmatmul.mubr.bf16.gmra.mxu0 %v741
  %v868 = vpop.f32.mrf.mxu0
  %v869 = vadd.f32 %v768, %v868
  %v870 = vpop.f32.mrf.mxu0
  %v871 = vpop.f32.mrf.mxu0
  %v872 = vadd.f32 %v768, %v871
  %v873 = vpop.f32.mrf.mxu0
  %874 = vmatprep.mubr.bf16.mxu0 0
  %875 = vmatmul.mubr.bf16.gmra.mxu0 %v742
  %v876 = vpop.f32.mrf.mxu0
  %v877 = vadd.f32 %v768, %v876
  %v878 = vpop.f32.mrf.mxu0
  %v879 = vpop.f32.mrf.mxu0
  %v880 = vadd.f32 %v768, %v879
  %v881 = vpop.f32.mrf.mxu0
  %882 = vmatprep.mubr.bf16.mxu0 0
  %883 = vmatmul.mubr.bf16.gmra.mxu0 %v743
  %v884 = vpop.f32.mrf.mxu0
  %v885 = vadd.f32 %v768, %v884
  %v886 = vpop.f32.mrf.mxu0
  %v887 = vpop.f32.mrf.mxu0
  %v888 = vadd.f32 %v768, %v887
  %v889 = vpop.f32.mrf.mxu0
  %890 = vmatprep.mubr.bf16.mxu0 0
  %891 = vmatmul.mubr.bf16.gmra.mxu0 %v744
  %v892 = vpop.f32.mrf.mxu0
  %v893 = vadd.f32 %v768, %v892
  %v894 = vpop.f32.mrf.mxu0
  %v895 = vpop.f32.mrf.mxu0
  %v896 = vadd.f32 %v768, %v895
  %v897 = vpop.f32.mrf.mxu0
  %898 = vmatprep.mubr.bf16.mxu0 0
  %899 = vmatmul.mubr.bf16.gmra.mxu0 %v745
  %v900 = vpop.f32.mrf.mxu0
  %v901 = vadd.f32 %v768, %v900
  %v902 = vpop.f32.mrf.mxu0
  %v903 = vpop.f32.mrf.mxu0
  %v904 = vadd.f32 %v768, %v903
  %v905 = vpop.f32.mrf.mxu0
  %906 = vmatprep.mubr.bf16.mxu0 0
  %907 = vmatmul.mubr.bf16.gmra.mxu0 %v746
  %v908 = vpop.f32.mrf.mxu0
  %v909 = vadd.f32 %v768, %v908
  %v910 = vpop.f32.mrf.mxu0
  %v911 = vpop.f32.mrf.mxu0
  %v912 = vadd.f32 %v768, %v911
  %v913 = vpop.f32.mrf.mxu0
  %914 = vdwg.mxu0
  %v915 = vmax.f32 %v853, 0.0
  %v916 = vmax.f32 %v856, 0.0
  %v917 = vmax.f32 %v861, 0.0
  %v918 = vmax.f32 %v864, 0.0
  %v919 = vmax.f32 %v869, 0.0
  %v920 = vmax.f32 %v872, 0.0
  %v921 = vmax.f32 %v877, 0.0
  %v922 = vmax.f32 %v880, 0.0
  %v923 = vmax.f32 %v885, 0.0
  %v924 = vmax.f32 %v888, 0.0
  %v925 = vmax.f32 %v893, 0.0
  %v926 = vmax.f32 %v896, 0.0
  %v927 = vmax.f32 %v901, 0.0
  %v928 = vmax.f32 %v904, 0.0
  %v929 = vmax.f32 %v909, 0.0
  %v930 = vmax.f32 %v912, 0.0
  %v931 = vpack.c.bf16 %v916, %v915
  %v932 = vpack.c.bf16 %v918, %v917
  %v933 = vpack.c.bf16 %v920, %v919
  %v934 = vpack.c.bf16 %v922, %v921
  %v935 = vpack.c.bf16 %v924, %v923
  %v936 = vpack.c.bf16 %v926, %v925
  %v937 = vpack.c.bf16 %v928, %v927
  %v938 = vpack.c.bf16 %v930, %v929
  %v947 = vunpack.c.l.b16 %v931
  %v948 = vunpack.c.h.b16 %v931
  %v949 = vunpack.c.l.b16 %v932
  %v950 = vunpack.c.h.b16 %v932
  %v951 = vunpack.c.l.b16 %v933
  %v952 = vunpack.c.h.b16 %v933
  %v953 = vunpack.c.l.b16 %v934
  %v954 = vunpack.c.h.b16 %v934
  %v955 = vunpack.c.l.b16 %v935
  %v956 = vunpack.c.h.b16 %v935
  %v957 = vunpack.c.l.b16 %v936
  %v958 = vunpack.c.h.b16 %v936
  %v959 = vunpack.c.l.b16 %v937
  %v960 = vunpack.c.h.b16 %v937
  %v961 = vunpack.c.l.b16 %v938
  %v962 = vunpack.c.h.b16 %v938
  %v963 = vpack.c.b16 %v947, %v947
  %v964 = vpack.c.b16 %v948, %v948
  %v965 = vpack.c.b16 %v949, %v949
  %v966 = vpack.c.b16 %v950, %v950
  %v967 = vpack.c.b16 %v951, %v951
  %v968 = vpack.c.b16 %v952, %v952
  %v969 = vpack.c.b16 %v953, %v953
  %v970 = vpack.c.b16 %v954, %v954
  %v971 = vpack.c.b16 %v955, %v955
  %v972 = vpack.c.b16 %v956, %v956
  %v973 = vpack.c.b16 %v957, %v957
  %v974 = vpack.c.b16 %v958, %v958
  %v975 = vpack.c.b16 %v959, %v959
  %v976 = vpack.c.b16 %v960, %v960
  %v977 = vpack.c.b16 %v961, %v961
  %v978 = vpack.c.b16 %v962, %v962
  %995 = vst [vmem:[%s10] sm:$0xf] %v963
  %996 = vst [vmem:[%s10 + $0x4] sm:$0xf] %v964
  %997 = vst [vmem:[%s10 + $0x8] sm:$0xf] %v965
  %998 = vst [vmem:[%s10 + $0xc] sm:$0xf] %v966
  %999 = vst [vmem:[%s10 + $0x10] sm:$0xf] %v967
  %1000 = vst [vmem:[%s10 + $0x14] sm:$0xf] %v968
  %1001 = vst [vmem:[%s10 + $0x18] sm:$0xf] %v969
  %1002 = vst [vmem:[%s10 + $0x1c] sm:$0xf] %v970
  %1003 = vst [vmem:[%s10 + $0x20] sm:$0xf] %v971
  %1004 = vst [vmem:[%s10 + $0x24] sm:$0xf] %v972
  %1005 = vst [vmem:[%s10 + $0x28] sm:$0xf] %v973
  %1006 = vst [vmem:[%s10 + $0x2c] sm:$0xf] %v974
  %1007 = vst [vmem:[%s10 + $0x30] sm:$0xf] %v975
  %1008 = vst [vmem:[%s10 + $0x34] sm:$0xf] %v976
  %1009 = vst [vmem:[%s10 + $0x38] sm:$0xf] %v977
  %1010 = vst [vmem:[%s10 + $0x3c] sm:$0xf] %v978
  // Predicated region
  $region38: #{regular_block_forward.2} parent=0 // pred_check
    _
  $region39: #{regular_block_forward.2} parent=0 // pred_check_branch
    %1012 = sbr.rel (0) target = $region41
  $region40: #{regular_block_forward.2} parent=0 // pred_region
    _
  $region41: #{regular_block_forward.2} parent=0 // pred_fallthru
    _
  // Predicated region
  $region42: #{regular_block_forward.2} parent=0 // pred_check
    _
  $region43: #{regular_block_forward.2} parent=0 // pred_check_branch
    %1014 = sbr.rel (0) target = $region45
  $region44: #{regular_block_forward.2} parent=0 // pred_region
    _
  $region45: #{regular_block_forward.2} parent=0 // pred_fallthru
    _
  // Predicated region
  $region46: #{regular_block_forward.2} parent=0 // pred_check
    _
  $region47: #{regular_block_forward.2} parent=0 // pred_check_branch
    %1016 = sbr.rel (0) target = $region49
  $region48: #{regular_block_forward.2} parent=0 // pred_region
    _
  $region49: #{regular_block_forward.2} parent=0 // pred_fallthru
    _
  // Predicated region
  $region50: #{regular_block_forward.2} parent=0 // pred_check
    _
  $region51: #{regular_block_forward.2} parent=0 // pred_check_branch
    %1018 = sbr.rel (0) target = $region53
  $region52: #{regular_block_forward.2} parent=0 // pred_region
    _
  $region53: #{regular_block_forward.2} parent=0 // pred_fallthru
    _

</llo_original>
